<compile_context>
chip_gen: v6e
topology: v6e:2x2x1
jax: 0.10.0
libtpu: 0.0.40
codegen_flags: <defaults>
</compile_context>

<pallas_src>
import functools

import jax
import jax.numpy as jnp
from jax.experimental import pallas as pl
from jax.experimental.pallas import tpu as pltpu

_LEAKY_SLOPE = 0.01  # nn.LeakyReLU() default negative_slope


def _round_up(x, m):
    return (x + m - 1) // m * m


def _conv_block_kernel(x_ref, w1_ref, b1_ref, w2_ref, b2_ref, o_ref, *, H, W):
    """Fused [conv3x3 + BN(eval) + LeakyReLU] x 2 for one image.

    x_ref : (1, Cin_p, H*W)      channels on sublanes, flat spatial on lanes
    w1_ref: (Cmid_p, 9*Cin_p)    conv1 taps (BN1 scale folded), col = (ky*3+kx)*Cin_p + c
    b1_ref: (Cmid_p, 1)          folded BN1 bias (includes conv1 bias)
    w2_ref: (Cout, 9*Cmid_p)     conv2 taps (BN2 scale folded)
    b2_ref: (Cout, 1)            folded BN2 bias
    o_ref : (1, Cout, H*W)
    """
    HW = H * W

    def shift(v, d):
        # y[:, p] = v[:, p + d] if 0 <= p + d < HW else 0   (d is a static int)
        if d == 0:
            return v
        c = v.shape[0]
        zeros = jnp.zeros((c, abs(d)), v.dtype)
        if d > 0:
            return jnp.concatenate([v[:, d:], zeros], axis=1)
        return jnp.concatenate([zeros, v[:, :HW + d]], axis=1)

    def im2col(v):
        # v: (C, H*W), C a multiple of 8  ->  (9*C, H*W); tap row order matches
        # the folded-weight column order k = (ky*3+kx)*C + c.
        c = v.shape[0]
        col = jax.lax.broadcasted_iota(jnp.int32, (c, HW), 1) % W
        ok_left = col >= 1          # reading column j-1 stays inside the row
        ok_right = col < (W - 1)    # reading column j+1 stays inside the row
        taps = []
        for oy in (-1, 0, 1):
            for ox in (-1, 0, 1):
                t = shift(v, oy * W + ox)   # zero-fill handles top/bottom rows
                if ox == -1:
                    t = jnp.where(ok_left, t, 0.0)
                elif ox == 1:
                    t = jnp.where(ok_right, t, 0.0)
                taps.append(t)
        # Each tap block is a whole number of sublane tiles -> aligned concat.
        return jnp.concatenate(taps, axis=0)

    def leaky(v):
        return jnp.where(v > 0, v, _LEAKY_SLOPE * v)

    x = x_ref[0]                                               # (Cin_p, H*W)

    # stage 1: conv1 (BN1 scale already in weights) + bias + LeakyReLU (in vregs)
    y1 = jnp.dot(w1_ref[...], im2col(x), preferred_element_type=jnp.float32)
    y1 = leaky(y1 + b1_ref[...])                               # (Cmid_p, H*W)

    # stage 2: conv2 + bias + LeakyReLU
    y2 = jnp.dot(w2_ref[...], im2col(y1), preferred_element_type=jnp.float32)
    y2 = leaky(y2 + b2_ref[...])                               # (Cout, H*W)

    o_ref[0] = y2                                              # one full-width store


def _fold_bn_pack(w, b, gamma, beta, rmean, rvar, *, eps, cin_pad, cout_pad):
    """Fold conv bias + eval-mode BN into packed (weight, bias) for the kernel.

    Returns:
      w_fold: (cout_pad, 9*cin_pad), column k = (ky*3+kx)*cin_pad + cin,
              BN scale folded into the rows; padded rows/columns are zero.
      bias  : (cout_pad, 1) = beta + scale*(b - running_mean), zero-padded.
    """
    cout, cin = w.shape[0], w.shape[1]
    scale = gamma / jnp.sqrt(rvar + eps)                       # (cout,)
    w_t = jnp.transpose(w, (0, 2, 3, 1)) * scale[:, None, None, None]  # (cout,3,3,cin)
    w_t = jnp.pad(w_t, ((0, cout_pad - cout), (0, 0), (0, 0), (0, cin_pad - cin)))
    w_fold = w_t.reshape(cout_pad, 9 * cin_pad)
    bias = beta + scale * (b - rmean)
    bias = jnp.pad(bias, (0, cout_pad - cout))
    return w_fold, bias.reshape(cout_pad, 1)


def conv_block_forward(x_nchw, params1, params2, eps=1e-5):
    """CONV_Block.forward (eval-mode BN). Input/output are NCHW (PyTorch layout)."""
    N, Cin, H, W = x_nchw.shape
    Cmid = params1[0].shape[0]
    Cout = params2[0].shape[0]
    HW = H * W

    # Channel dims that feed an im2col are padded to a sublane multiple (8) so the
    # 9-way sublane concat in-kernel is tile-aligned. Cout needs no padding.
    Cin_p = _round_up(Cin, 8)
    Cmid_p = _round_up(Cmid, 8)

    w1f, b1 = _fold_bn_pack(*params1, eps=eps, cin_pad=Cin_p, cout_pad=Cmid_p)
    w2f, b2 = _fold_bn_pack(*params2, eps=eps, cin_pad=Cmid_p, cout_pad=Cout)

    # NCHW -> (N, C, H*W) is a pure reshape: channels on sublanes, flat spatial
    # on lanes (lane-dense). No NHWC transpose in or out.
    x_flat = x_nchw.reshape(N, Cin, HW)
    if Cin_p != Cin:
        x_flat = jnp.pad(x_flat, ((0, 0), (0, Cin_p - Cin), (0, 0)))

    kernel = functools.partial(_conv_block_kernel, H=H, W=W)

    # grid=(N,) + "parallel": N=2 images split across v7x's two TensorCores;
    # on v5e/v6e this is a tiny 2-step serial loop.
    # TODO(synk): at realistic sizes (C>=128, big H/W) add a row-tile grid axis
    # and set vmem_limit_bytes (v7x has 64 MiB physical VMEM).
    out_flat = pl.pallas_call(
        kernel,
        out_shape=jax.ShapeDtypeStruct((N, Cout, HW), jnp.float32),
        grid=(N,),
        in_specs=[
            pl.BlockSpec((1, Cin_p, HW), lambda n: (n, 0, 0)),
            pl.BlockSpec((Cmid_p, 9 * Cin_p), lambda n: (0, 0)),
            pl.BlockSpec((Cmid_p, 1), lambda n: (0, 0)),
            pl.BlockSpec((Cout, 9 * Cmid_p), lambda n: (0, 0)),
            pl.BlockSpec((Cout, 1), lambda n: (0, 0)),
        ],
        out_specs=pl.BlockSpec((1, Cout, HW), lambda n: (n, 0, 0)),
        compiler_params=pltpu.CompilerParams(
            dimension_semantics=("parallel",)),
    )(x_flat, w1f, b1, w2f, b2)

    return out_flat.reshape(N, Cout, H, W)


# ----------------------------- reference (plain JAX) -------------------------
def _ref_stage(x, w, b, gamma, beta, rmean, rvar, eps=1e-5):
    y = jax.lax.conv_general_dilated(
        x, w, window_strides=(1, 1), padding="SAME",
        dimension_numbers=("NCHW", "OIHW", "NCHW"))
    y = y + b[None, :, None, None]
    y = (y - rmean[None, :, None, None]) * (gamma / jnp.sqrt(rvar + eps))[None, :, None, None] \
        + beta[None, :, None, None]
    return jnp.where(y > 0, y, _LEAKY_SLOPE * y)


def _ref_forward(x_nchw, params1, params2):
    x = _ref_stage(x_nchw, *params1)
    return _ref_stage(x, *params2)


# ----------------------------------- main ------------------------------------
def _make_params(key, cin, cout):
    ks = jax.random.split(key, 6)
    w = 0.2 * jax.random.normal(ks[0], (cout, cin, 3, 3), jnp.float32)
    b = 0.1 * jax.random.normal(ks[1], (cout,), jnp.float32)
    gamma = 1.0 + 0.1 * jax.random.normal(ks[2], (cout,), jnp.float32)
    beta = 0.1 * jax.random.normal(ks[3], (cout,), jnp.float32)
    rmean = 0.1 * jax.random.normal(ks[4], (cout,), jnp.float32)
    rvar = jax.random.uniform(ks[5], (cout,), jnp.float32, minval=0.5, maxval=1.5)
    return w, b, gamma, beta, rmean, rvar


if __name__ == "__main__":
    key = jax.random.PRNGKey(0)
    k_x, k_p1, k_p2 = jax.random.split(key, 3)

    N, in_ch, mid_ch, out_ch, H, W = 2, 4, 8, 4, 16, 16
    x = jax.random.normal(k_x, (N, in_ch, H, W), jnp.float32)   # NCHW like PyTorch

    params1 = _make_params(k_p1, in_ch, mid_ch)   # conv1: in_channels -> middle_channels
    params2 = _make_params(k_p2, mid_ch, out_ch)  # conv2: middle_channels -> out_channels

    out = conv_block_forward(x, params1, params2)
    out = jax.block_until_ready(out)

    assert out.shape == (N, out_ch, H, W), out.shape

    ref = _ref_forward(x, params1, params2)
    assert jnp.allclose(out, ref, atol=1e-4, rtol=1e-4), \
        float(jnp.max(jnp.abs(out - ref)))

    print("KERNEL_OK")
</pallas_src>

<mosaic_0001>
module attributes {stable_mosaic.version = 11 : i64} {
  func.func @_conv_block_kernel(%arg0: i32, %arg1: memref<1x8x256xf32, #tpu.memory_space<vmem>>, %arg2: memref<8x72xf32, #tpu.memory_space<vmem>>, %arg3: memref<8x1xf32, #tpu.memory_space<vmem>>, %arg4: memref<4x72xf32, #tpu.memory_space<vmem>>, %arg5: memref<4x1xf32, #tpu.memory_space<vmem>>, %arg6: memref<1x4x256xf32, #tpu.memory_space<vmem>>) attributes {dimension_semantics = [#tpu.dimension_semantics<parallel>], iteration_bounds = array<i64: 2>, scalar_prefetch = 0 : i64, scratch_operands = 0 : i64, tpu.core_type = #tpu.core_type<tc>, window_params = [{transform_indices = @transform_0, window_bounds = array<i64: 1, 8, 256>}, {pipeline_mode = #tpu.pipeline_mode<synchronous>, transform_indices = @transform_1, window_bounds = array<i64: 8, 72>}, {pipeline_mode = #tpu.pipeline_mode<synchronous>, transform_indices = @transform_2, window_bounds = array<i64: 8, 1>}, {pipeline_mode = #tpu.pipeline_mode<synchronous>, transform_indices = @transform_3, window_bounds = array<i64: 4, 72>}, {pipeline_mode = #tpu.pipeline_mode<synchronous>, transform_indices = @transform_4, window_bounds = array<i64: 4, 1>}, {transform_indices = @transform_5, window_bounds = array<i64: 1, 4, 256>}]} {
    %c0 = arith.constant 0 : index
    %c0_0 = arith.constant 0 : index
    %c0_1 = arith.constant 0 : index
    %0 = vector.load %arg1[%c0, %c0_0, %c0_1] : memref<1x8x256xf32, #tpu.memory_space<vmem>>, vector<1x8x256xf32>
    %1 = vector.shape_cast %0 : vector<1x8x256xf32> to vector<8x256xf32>
    %c0_2 = arith.constant 0 : index
    %c0_3 = arith.constant 0 : index
    %2 = vector.load %arg2[%c0_2, %c0_3] : memref<8x72xf32, #tpu.memory_space<vmem>>, vector<8x72xf32>
    %3 = tpu.iota {dimensions = array<i32: 1>} : vector<8x256xi32>
    %c16_i32 = arith.constant 16 : i32
    %c0_i32 = arith.constant 0 : i32
    %4 = arith.cmpi eq, %c16_i32, %c0_i32 : i32
    %c1_i32 = arith.constant 1 : i32
    %5 = arith.select %4, %c1_i32, %c16_i32 : i32
    %6 = vector.broadcast %5 : i32 to vector<8x256xi32>
    %7 = arith.remsi %3, %6 : vector<8x256xi32>
    %c0_i32_4 = arith.constant 0 : i32
    %8 = vector.broadcast %c0_i32_4 : i32 to vector<8x256xi32>
    %9 = arith.cmpi ne, %7, %8 : vector<8x256xi32>
    %c0_i32_5 = arith.constant 0 : i32
    %10 = vector.broadcast %c0_i32_5 : i32 to vector<8x256xi32>
    %11 = arith.cmpi slt, %7, %10 : vector<8x256xi32>
    %c0_i32_6 = arith.constant 0 : i32
    %12 = arith.cmpi slt, %5, %c0_i32_6 : i32
    %13 = vector.broadcast %12 : i1 to vector<8x256xi1>
    %14 = vector.broadcast %13 : vector<8x256xi1> to vector<8x256xi1>
    %15 = arith.xori %11, %14 : vector<8x256xi1>
    %16 = arith.andi %15, %9 : vector<8x256xi1>
    %17 = vector.broadcast %5 : i32 to vector<8x256xi32>
    %18 = arith.addi %7, %17 : vector<8x256xi32>
    %19 = arith.select %16, %18, %7 : vector<8x256xi1>, vector<8x256xi32>
    %c1_i32_7 = arith.constant 1 : i32
    %20 = vector.broadcast %c1_i32_7 : i32 to vector<8x256xi32>
    %21 = arith.cmpi sge, %19, %20 : vector<8x256xi32>
    %c15_i32 = arith.constant 15 : i32
    %22 = vector.broadcast %c15_i32 : i32 to vector<8x256xi32>
    %23 = arith.cmpi slt, %19, %22 : vector<8x256xi32>
    %cst = arith.constant 0.000000e+00 : f32
    %24 = vector.broadcast %cst : f32 to vector<8x17xf32>
    %25 = vector.extract_strided_slice %1 {offsets = [0, 0], sizes = [8, 239], strides = [1, 1]} : vector<8x256xf32> to vector<8x239xf32>
    %26 = tpu.concatenate %24, %25 in 1 : vector<8x17xf32>, vector<8x239xf32> -> vector<8x256xf32>
    %cst_8 = arith.constant 0.000000e+00 : f32
    %27 = vector.broadcast %cst_8 : f32 to vector<8x256xf32>
    %28 = arith.select %21, %26, %27 : vector<8x256xi1>, vector<8x256xf32>
    %cst_9 = arith.constant 0.000000e+00 : f32
    %29 = vector.broadcast %cst_9 : f32 to vector<8x16xf32>
    %30 = vector.extract_strided_slice %1 {offsets = [0, 0], sizes = [8, 240], strides = [1, 1]} : vector<8x256xf32> to vector<8x240xf32>
    %31 = tpu.concatenate %29, %30 in 1 : vector<8x16xf32>, vector<8x240xf32> -> vector<8x256xf32>
    %cst_10 = arith.constant 0.000000e+00 : f32
    %32 = vector.broadcast %cst_10 : f32 to vector<8x15xf32>
    %33 = vector.extract_strided_slice %1 {offsets = [0, 0], sizes = [8, 241], strides = [1, 1]} : vector<8x256xf32> to vector<8x241xf32>
    %34 = tpu.concatenate %32, %33 in 1 : vector<8x15xf32>, vector<8x241xf32> -> vector<8x256xf32>
    %cst_11 = arith.constant 0.000000e+00 : f32
    %35 = vector.broadcast %cst_11 : f32 to vector<8x256xf32>
    %36 = arith.select %23, %34, %35 : vector<8x256xi1>, vector<8x256xf32>
    %cst_12 = arith.constant 0.000000e+00 : f32
    %37 = vector.broadcast %cst_12 : f32 to vector<8x1xf32>
    %38 = vector.extract_strided_slice %1 {offsets = [0, 0], sizes = [8, 255], strides = [1, 1]} : vector<8x256xf32> to vector<8x255xf32>
    %39 = tpu.concatenate %37, %38 in 1 : vector<8x1xf32>, vector<8x255xf32> -> vector<8x256xf32>
    %cst_13 = arith.constant 0.000000e+00 : f32
    %40 = vector.broadcast %cst_13 : f32 to vector<8x256xf32>
    %41 = arith.select %21, %39, %40 : vector<8x256xi1>, vector<8x256xf32>
    %cst_14 = arith.constant 0.000000e+00 : f32
    %42 = vector.broadcast %cst_14 : f32 to vector<8x1xf32>
    %43 = vector.extract_strided_slice %1 {offsets = [0, 1], sizes = [8, 255], strides = [1, 1]} : vector<8x256xf32> to vector<8x255xf32>
    %44 = tpu.concatenate %43, %42 in 1 : vector<8x255xf32>, vector<8x1xf32> -> vector<8x256xf32>
    %cst_15 = arith.constant 0.000000e+00 : f32
    %45 = vector.broadcast %cst_15 : f32 to vector<8x256xf32>
    %46 = arith.select %23, %44, %45 : vector<8x256xi1>, vector<8x256xf32>
    %cst_16 = arith.constant 0.000000e+00 : f32
    %47 = vector.broadcast %cst_16 : f32 to vector<8x15xf32>
    %48 = vector.extract_strided_slice %1 {offsets = [0, 15], sizes = [8, 241], strides = [1, 1]} : vector<8x256xf32> to vector<8x241xf32>
    %49 = tpu.concatenate %48, %47 in 1 : vector<8x241xf32>, vector<8x15xf32> -> vector<8x256xf32>
    %cst_17 = arith.constant 0.000000e+00 : f32
    %50 = vector.broadcast %cst_17 : f32 to vector<8x256xf32>
    %51 = arith.select %21, %49, %50 : vector<8x256xi1>, vector<8x256xf32>
    %cst_18 = arith.constant 0.000000e+00 : f32
    %52 = vector.broadcast %cst_18 : f32 to vector<8x16xf32>
    %53 = vector.extract_strided_slice %1 {offsets = [0, 16], sizes = [8, 240], strides = [1, 1]} : vector<8x256xf32> to vector<8x240xf32>
    %54 = tpu.concatenate %53, %52 in 1 : vector<8x240xf32>, vector<8x16xf32> -> vector<8x256xf32>
    %cst_19 = arith.constant 0.000000e+00 : f32
    %55 = vector.broadcast %cst_19 : f32 to vector<8x17xf32>
    %56 = vector.extract_strided_slice %1 {offsets = [0, 17], sizes = [8, 239], strides = [1, 1]} : vector<8x256xf32> to vector<8x239xf32>
    %57 = tpu.concatenate %56, %55 in 1 : vector<8x239xf32>, vector<8x17xf32> -> vector<8x256xf32>
    %cst_20 = arith.constant 0.000000e+00 : f32
    %58 = vector.broadcast %cst_20 : f32 to vector<8x256xf32>
    %59 = arith.select %23, %57, %58 : vector<8x256xi1>, vector<8x256xf32>
    %60 = tpu.concatenate %28, %31, %36, %41, %1, %46, %51, %54, %59 in 0 : vector<8x256xf32>, vector<8x256xf32>, vector<8x256xf32>, vector<8x256xf32>, vector<8x256xf32>, vector<8x256xf32>, vector<8x256xf32>, vector<8x256xf32>, vector<8x256xf32> -> vector<72x256xf32>
    %cst_21 = arith.constant dense<0.000000e+00> : vector<8x256xf32>
    %61 = tpu.matmul %2, %60, %cst_21 {dimension_numbers = #tpu.dot_dimension_numbers<[1], [0], [0], [1], [0, 0, 1, 1], [], []>} : vector<8x72xf32>, vector<72x256xf32>, vector<8x256xf32> -> vector<8x256xf32>
    %c0_22 = arith.constant 0 : index
    %c0_23 = arith.constant 0 : index
    %62 = vector.load %arg3[%c0_22, %c0_23] : memref<8x1xf32, #tpu.memory_space<vmem>>, vector<8x1xf32>
    %63 = vector.broadcast %62 : vector<8x1xf32> to vector<8x256xf32>
    %64 = arith.addf %61, %63 : vector<8x256xf32>
    %cst_24 = arith.constant 0.000000e+00 : f32
    %65 = vector.broadcast %cst_24 : f32 to vector<8x256xf32>
    %66 = arith.cmpf ogt, %64, %65 : vector<8x256xf32>
    %cst_25 = arith.constant 0.00999999977 : f32
    %67 = vector.broadcast %cst_25 : f32 to vector<8x256xf32>
    %68 = arith.mulf %67, %64 : vector<8x256xf32>
    %69 = arith.select %66, %64, %68 : vector<8x256xi1>, vector<8x256xf32>
    %c0_26 = arith.constant 0 : index
    %c0_27 = arith.constant 0 : index
    %70 = vector.load %arg4[%c0_26, %c0_27] : memref<4x72xf32, #tpu.memory_space<vmem>>, vector<4x72xf32>
    %71 = tpu.iota {dimensions = array<i32: 1>} : vector<8x256xi32>
    %c16_i32_28 = arith.constant 16 : i32
    %c0_i32_29 = arith.constant 0 : i32
    %72 = arith.cmpi eq, %c16_i32_28, %c0_i32_29 : i32
    %c1_i32_30 = arith.constant 1 : i32
    %73 = arith.select %72, %c1_i32_30, %c16_i32_28 : i32
    %74 = vector.broadcast %73 : i32 to vector<8x256xi32>
    %75 = arith.remsi %71, %74 : vector<8x256xi32>
    %c0_i32_31 = arith.constant 0 : i32
    %76 = vector.broadcast %c0_i32_31 : i32 to vector<8x256xi32>
    %77 = arith.cmpi ne, %75, %76 : vector<8x256xi32>
    %c0_i32_32 = arith.constant 0 : i32
    %78 = vector.broadcast %c0_i32_32 : i32 to vector<8x256xi32>
    %79 = arith.cmpi slt, %75, %78 : vector<8x256xi32>
    %c0_i32_33 = arith.constant 0 : i32
    %80 = arith.cmpi slt, %73, %c0_i32_33 : i32
    %81 = vector.broadcast %80 : i1 to vector<8x256xi1>
    %82 = vector.broadcast %81 : vector<8x256xi1> to vector<8x256xi1>
    %83 = arith.xori %79, %82 : vector<8x256xi1>
    %84 = arith.andi %83, %77 : vector<8x256xi1>
    %85 = vector.broadcast %73 : i32 to vector<8x256xi32>
    %86 = arith.addi %75, %85 : vector<8x256xi32>
    %87 = arith.select %84, %86, %75 : vector<8x256xi1>, vector<8x256xi32>
    %c1_i32_34 = arith.constant 1 : i32
    %88 = vector.broadcast %c1_i32_34 : i32 to vector<8x256xi32>
    %89 = arith.cmpi sge, %87, %88 : vector<8x256xi32>
    %c15_i32_35 = arith.constant 15 : i32
    %90 = vector.broadcast %c15_i32_35 : i32 to vector<8x256xi32>
    %91 = arith.cmpi slt, %87, %90 : vector<8x256xi32>
    %cst_36 = arith.constant 0.000000e+00 : f32
    %92 = vector.broadcast %cst_36 : f32 to vector<8x17xf32>
    %93 = vector.extract_strided_slice %69 {offsets = [0, 0], sizes = [8, 239], strides = [1, 1]} : vector<8x256xf32> to vector<8x239xf32>
    %94 = tpu.concatenate %92, %93 in 1 : vector<8x17xf32>, vector<8x239xf32> -> vector<8x256xf32>
    %cst_37 = arith.constant 0.000000e+00 : f32
    %95 = vector.broadcast %cst_37 : f32 to vector<8x256xf32>
    %96 = arith.select %89, %94, %95 : vector<8x256xi1>, vector<8x256xf32>
    %cst_38 = arith.constant 0.000000e+00 : f32
    %97 = vector.broadcast %cst_38 : f32 to vector<8x16xf32>
    %98 = vector.extract_strided_slice %69 {offsets = [0, 0], sizes = [8, 240], strides = [1, 1]} : vector<8x256xf32> to vector<8x240xf32>
    %99 = tpu.concatenate %97, %98 in 1 : vector<8x16xf32>, vector<8x240xf32> -> vector<8x256xf32>
    %cst_39 = arith.constant 0.000000e+00 : f32
    %100 = vector.broadcast %cst_39 : f32 to vector<8x15xf32>
    %101 = vector.extract_strided_slice %69 {offsets = [0, 0], sizes = [8, 241], strides = [1, 1]} : vector<8x256xf32> to vector<8x241xf32>
    %102 = tpu.concatenate %100, %101 in 1 : vector<8x15xf32>, vector<8x241xf32> -> vector<8x256xf32>
    %cst_40 = arith.constant 0.000000e+00 : f32
    %103 = vector.broadcast %cst_40 : f32 to vector<8x256xf32>
    %104 = arith.select %91, %102, %103 : vector<8x256xi1>, vector<8x256xf32>
    %cst_41 = arith.constant 0.000000e+00 : f32
    %105 = vector.broadcast %cst_41 : f32 to vector<8x1xf32>
    %106 = vector.extract_strided_slice %69 {offsets = [0, 0], sizes = [8, 255], strides = [1, 1]} : vector<8x256xf32> to vector<8x255xf32>
    %107 = tpu.concatenate %105, %106 in 1 : vector<8x1xf32>, vector<8x255xf32> -> vector<8x256xf32>
    %cst_42 = arith.constant 0.000000e+00 : f32
    %108 = vector.broadcast %cst_42 : f32 to vector<8x256xf32>
    %109 = arith.select %89, %107, %108 : vector<8x256xi1>, vector<8x256xf32>
    %cst_43 = arith.constant 0.000000e+00 : f32
    %110 = vector.broadcast %cst_43 : f32 to vector<8x1xf32>
    %111 = vector.extract_strided_slice %69 {offsets = [0, 1], sizes = [8, 255], strides = [1, 1]} : vector<8x256xf32> to vector<8x255xf32>
    %112 = tpu.concatenate %111, %110 in 1 : vector<8x255xf32>, vector<8x1xf32> -> vector<8x256xf32>
    %cst_44 = arith.constant 0.000000e+00 : f32
    %113 = vector.broadcast %cst_44 : f32 to vector<8x256xf32>
    %114 = arith.select %91, %112, %113 : vector<8x256xi1>, vector<8x256xf32>
    %cst_45 = arith.constant 0.000000e+00 : f32
    %115 = vector.broadcast %cst_45 : f32 to vector<8x15xf32>
    %116 = vector.extract_strided_slice %69 {offsets = [0, 15], sizes = [8, 241], strides = [1, 1]} : vector<8x256xf32> to vector<8x241xf32>
    %117 = tpu.concatenate %116, %115 in 1 : vector<8x241xf32>, vector<8x15xf32> -> vector<8x256xf32>
    %cst_46 = arith.constant 0.000000e+00 : f32
    %118 = vector.broadcast %cst_46 : f32 to vector<8x256xf32>
    %119 = arith.select %89, %117, %118 : vector<8x256xi1>, vector<8x256xf32>
    %cst_47 = arith.constant 0.000000e+00 : f32
    %120 = vector.broadcast %cst_47 : f32 to vector<8x16xf32>
    %121 = vector.extract_strided_slice %69 {offsets = [0, 16], sizes = [8, 240], strides = [1, 1]} : vector<8x256xf32> to vector<8x240xf32>
    %122 = tpu.concatenate %121, %120 in 1 : vector<8x240xf32>, vector<8x16xf32> -> vector<8x256xf32>
    %cst_48 = arith.constant 0.000000e+00 : f32
    %123 = vector.broadcast %cst_48 : f32 to vector<8x17xf32>
    %124 = vector.extract_strided_slice %69 {offsets = [0, 17], sizes = [8, 239], strides = [1, 1]} : vector<8x256xf32> to vector<8x239xf32>
    %125 = tpu.concatenate %124, %123 in 1 : vector<8x239xf32>, vector<8x17xf32> -> vector<8x256xf32>
    %cst_49 = arith.constant 0.000000e+00 : f32
    %126 = vector.broadcast %cst_49 : f32 to vector<8x256xf32>
    %127 = arith.select %91, %125, %126 : vector<8x256xi1>, vector<8x256xf32>
    %128 = tpu.concatenate %96, %99, %104, %109, %69, %114, %119, %122, %127 in 0 : vector<8x256xf32>, vector<8x256xf32>, vector<8x256xf32>, vector<8x256xf32>, vector<8x256xf32>, vector<8x256xf32>, vector<8x256xf32>, vector<8x256xf32>, vector<8x256xf32> -> vector<72x256xf32>
    %cst_50 = arith.constant dense<0.000000e+00> : vector<4x256xf32>
    %129 = tpu.matmul %70, %128, %cst_50 {dimension_numbers = #tpu.dot_dimension_numbers<[1], [0], [0], [1], [0, 0, 1, 1], [], []>} : vector<4x72xf32>, vector<72x256xf32>, vector<4x256xf32> -> vector<4x256xf32>
    %c0_51 = arith.constant 0 : index
    %c0_52 = arith.constant 0 : index
    %130 = vector.load %arg5[%c0_51, %c0_52] : memref<4x1xf32, #tpu.memory_space<vmem>>, vector<4x1xf32>
    %131 = vector.broadcast %130 : vector<4x1xf32> to vector<4x256xf32>
    %132 = arith.addf %129, %131 : vector<4x256xf32>
    %cst_53 = arith.constant 0.000000e+00 : f32
    %133 = vector.broadcast %cst_53 : f32 to vector<4x256xf32>
    %134 = arith.cmpf ogt, %132, %133 : vector<4x256xf32>
    %cst_54 = arith.constant 0.00999999977 : f32
    %135 = vector.broadcast %cst_54 : f32 to vector<4x256xf32>
    %136 = arith.mulf %135, %132 : vector<4x256xf32>
    %137 = arith.select %134, %132, %136 : vector<4x256xi1>, vector<4x256xf32>
    %c0_55 = arith.constant 0 : index
    %c0_56 = arith.constant 0 : index
    %c0_57 = arith.constant 0 : index
    %138 = vector.load %arg6[%c0_55, %c0_56, %c0_57] : memref<1x4x256xf32, #tpu.memory_space<vmem>>, vector<1x4x256xf32>
    %139 = vector.shape_cast %138 : vector<1x4x256xf32> to vector<4x256xf32>
    %140 = vector.shape_cast %137 : vector<4x256xf32> to vector<1x4x256xf32>
    tpu.vector_store %arg6[%c0_55, %c0_56, %c0_57], %140 {strides = array<i32>} : memref<1x4x256xf32, #tpu.memory_space<vmem>>, vector<1x4x256xf32>,
    return
  }
  func.func @transform_0(%arg0: i32) -> (i32, i32, i32) {
    %c0_i32 = arith.constant 0 : i32
    %c0_i32_0 = arith.constant 0 : i32
    %c0_i32_1 = arith.constant 0 : i32
    return %arg0, %c0_i32, %c0_i32_0 : i32, i32, i32
  }
  func.func @transform_1(%arg0: i32) -> (i32, i32) {
    %c0_i32 = arith.constant 0 : i32
    %c0_i32_0 = arith.constant 0 : i32
    %c0_i32_1 = arith.constant 0 : i32
    return %c0_i32, %c0_i32_0 : i32, i32
  }
  func.func @transform_2(%arg0: i32) -> (i32, i32) {
    %c0_i32 = arith.constant 0 : i32
    %c0_i32_0 = arith.constant 0 : i32
    %c0_i32_1 = arith.constant 0 : i32
    return %c0_i32, %c0_i32_0 : i32, i32
  }
  func.func @transform_3(%arg0: i32) -> (i32, i32) {
    %c0_i32 = arith.constant 0 : i32
    %c0_i32_0 = arith.constant 0 : i32
    %c0_i32_1 = arith.constant 0 : i32
    return %c0_i32, %c0_i32_0 : i32, i32
  }
  func.func @transform_4(%arg0: i32) -> (i32, i32) {
    %c0_i32 = arith.constant 0 : i32
    %c0_i32_0 = arith.constant 0 : i32
    %c0_i32_1 = arith.constant 0 : i32
    return %c0_i32, %c0_i32_0 : i32, i32
  }
  func.func @transform_5(%arg0: i32) -> (i32, i32, i32) {
    %c0_i32 = arith.constant 0 : i32
    %c0_i32_0 = arith.constant 0 : i32
    %c0_i32_1 = arith.constant 0 : i32
    return %arg0, %c0_i32, %c0_i32_0 : i32, i32, i32
  }
}

</mosaic_0001>

<llo_original>
// kernel: tpu_custom_call.1
$region0: #{tpu_custom_call.1}
  #allocation0 [shape = 'u32[]', space=smem, size = 0x4, offset = 0x4, fixed_abs, tag = 'smem constant byte address 0x4 - core index']
  #allocation1 [shape = 'u32[144,128]{1,0:T(1,128)}', space=vmem, size = 0x12000, scoped, tag = 'internal scratch']
  %s0 = inlined_call_operand.hbm [shape: f32[2,8,256], index: 0, kind: input, shape index: {}]
  %s1 = inlined_call_operand.vmem [shape: f32[8,72], index: 1, kind: input, shape index: {}]
  %s2 = inlined_call_operand.vmem [shape: f32[8,1], index: 2, kind: input, shape index: {}]
  %s3 = inlined_call_operand.vmem [shape: f32[4,72], index: 3, kind: input, shape index: {}]
  %s4 = inlined_call_operand.vmem [shape: f32[4,1], index: 4, kind: input, shape index: {}]
  %s5 = inlined_call_operand.hbm [shape: f32[2,4,256], index: 5, kind: output, shape index: {}]
  %s6 = sld [smem:[#allocation0]]
  $region57: #{tpu_custom_call.1} parent=0
    _
  %s8 = ssub.s32 1, %s6
  %s9 = scalar_select 0, %s8, %s6
  $region1: #{tpu_custom_call.1} parent=0
    #allocation2 [shape = 'u8[16384]{0}', space=vmem, size = 0x4000, scoped, tag = 'input window, operand 0']
    #allocation3 [shape = 's32[2]{0}', space=sflag, size = 0x8, scoped, tag = 'scoped memory for tpu_custom_call.1']
    #allocation4 [shape = 's32[2]{0}', space=sflag, size = 0x8, scoped, tag = 'scoped memory for tpu_custom_call.1']
    #allocation5 [shape = 'u8[8192]{0}', space=vmem, size = 0x2000, scoped, tag = 'output window, operand 0']
    %10 = vsyncpa [#allocation3], 0
    %s11 = scalar_lea.sflag [#allocation3], 1
    %12 = vsyncpa %s11, 0
    %13 = vsyncpa [#allocation4], 0
    %s14 = scalar_lea.sflag [#allocation4], 1
    %15 = vsyncpa %s14, 0
    loop: start=0, step=1, limit=4
    $region2: #{tpu_custom_call.1} parent=1 // loop_pre_header
      _
    $region3: #{tpu_custom_call.1} parent=1 // loop_header
      %s17 = sphi 0, %s21
      %p18 = scmp.ge.s32.totalorder %s17, 4
      %s27 = sphi 0, %s29
      %s30 = sphi 0, %s27
      %s31 = sphi 0, %s30
      %s47 = sphi 0, %s31
      %s51 = sphi 0, %s51
      %s53 = sphi 0, %s51
      %s54 = sphi 0, %s53
      %s68 = sphi 0, %s54
      %s72 = sphi 0, %s72
      %s74 = sphi 0, %s72
      %s75 = sphi 0, %s74
      %s89 = sphi 0, %s75
      %s93 = sphi 0, %s93
      %s95 = sphi 0, %s93
      %s96 = sphi 0, %s95
      %s110 = sphi 0, %s96
      %s114 = sphi 0, %s114
      %s116 = sphi 0, %s114
      %s117 = sphi 0, %s116
      %s131 = sphi 0, %s117
      %s137 = sphi 0, %s139
      %s140 = sphi 0, %s137
      %s141 = sphi 0, %s140
      %s157 = sphi 0, %s141
    $region4: #{tpu_custom_call.1} parent=1 // loop_header_branch
      %20 = sbr.rel (%p18) target = $region8
    $region5: #{tpu_custom_call.1} parent=1 // loop_body
      %s22 = ssub.s32 %s17, 1
      %s23 = ssub.s32 %s17, 2
      %s24 = sadd.s32 %s17, 1
      %s25 = ssub.s32 %s17, %s24
      %p26 = scmp.eq.s32.totalorder %s25, 0
      %s28 = sadd.s32 %s27, 1
      %s29 = scalar_select %p26, %s27, %s28
      %p32 = pneg %p26
      %p33 = scmp.eq.s32.totalorder %s17, 1
      %p34 = por %p32, %p33
      %p35 = scmp.ne.s32.totalorder %s27, %s30
      %p36 = scmp.eq.s32.totalorder %s17, 0
      %p37 = por %p35, %p36
      %p38 = scmp.ne.s32.totalorder %s27, %s30
      %p39 = scmp.eq.s32.totalorder %s22, 1
      %p40 = por %p38, %p39
      %p41 = scmp.ne.s32.totalorder %s30, %s31
      %p42 = scmp.eq.s32.totalorder %s22, 0
      %p43 = por %p41, %p42
      %p44 = scmp.ne.s32.totalorder %s30, %s31
      %p45 = scmp.eq.s32.totalorder %s23, 1
      %p46 = por %p44, %p45
      %p48 = scmp.ne.s32.totalorder %s31, %s47
      %p49 = scmp.eq.s32.totalorder %s23, 0
      %p50 = por %p48, %p49
      %s52 = sadd.s32 %s51, 1
      %p55 = scmp.eq.s32.totalorder %s17, 1
      %p56 = scmp.ne.s32.totalorder %s51, %s53
      %p57 = scmp.eq.s32.totalorder %s17, 0
      %p58 = por %p56, %p57
      %p59 = scmp.ne.s32.totalorder %s51, %s53
      %p60 = scmp.eq.s32.totalorder %s22, 1
      %p61 = por %p59, %p60
      %p62 = scmp.ne.s32.totalorder %s53, %s54
      %p63 = scmp.eq.s32.totalorder %s22, 0
      %p64 = por %p62, %p63
      %p65 = scmp.ne.s32.totalorder %s53, %s54
      %p66 = scmp.eq.s32.totalorder %s23, 1
      %p67 = por %p65, %p66
      %p69 = scmp.ne.s32.totalorder %s54, %s68
      %p70 = scmp.eq.s32.totalorder %s23, 0
      %p71 = por %p69, %p70
      %s73 = sadd.s32 %s72, 1
      %p76 = scmp.eq.s32.totalorder %s17, 1
      %p77 = scmp.ne.s32.totalorder %s72, %s74
      %p78 = scmp.eq.s32.totalorder %s17, 0
      %p79 = por %p77, %p78
      %p80 = scmp.ne.s32.totalorder %s72, %s74
      %p81 = scmp.eq.s32.totalorder %s22, 1
      %p82 = por %p80, %p81
      %p83 = scmp.ne.s32.totalorder %s74, %s75
      %p84 = scmp.eq.s32.totalorder %s22, 0
      %p85 = por %p83, %p84
      %p86 = scmp.ne.s32.totalorder %s74, %s75
      %p87 = scmp.eq.s32.totalorder %s23, 1
      %p88 = por %p86, %p87
      %p90 = scmp.ne.s32.totalorder %s75, %s89
      %p91 = scmp.eq.s32.totalorder %s23, 0
      %p92 = por %p90, %p91
      %s94 = sadd.s32 %s93, 1
      %p97 = scmp.eq.s32.totalorder %s17, 1
      %p98 = scmp.ne.s32.totalorder %s93, %s95
      %p99 = scmp.eq.s32.totalorder %s17, 0
      %p100 = por %p98, %p99
      %p101 = scmp.ne.s32.totalorder %s93, %s95
      %p102 = scmp.eq.s32.totalorder %s22, 1
      %p103 = por %p101, %p102
      %p104 = scmp.ne.s32.totalorder %s95, %s96
      %p105 = scmp.eq.s32.totalorder %s22, 0
      %p106 = por %p104, %p105
      %p107 = scmp.ne.s32.totalorder %s95, %s96
      %p108 = scmp.eq.s32.totalorder %s23, 1
      %p109 = por %p107, %p108
      %p111 = scmp.ne.s32.totalorder %s96, %s110
      %p112 = scmp.eq.s32.totalorder %s23, 0
      %p113 = por %p111, %p112
      %s115 = sadd.s32 %s114, 1
      %p118 = scmp.eq.s32.totalorder %s17, 1
      %p119 = scmp.ne.s32.totalorder %s114, %s116
      %p120 = scmp.eq.s32.totalorder %s17, 0
      %p121 = por %p119, %p120
      %p122 = scmp.ne.s32.totalorder %s114, %s116
      %p123 = scmp.eq.s32.totalorder %s22, 1
      %p124 = por %p122, %p123
      %p125 = scmp.ne.s32.totalorder %s116, %s117
      %p126 = scmp.eq.s32.totalorder %s22, 0
      %p127 = por %p125, %p126
      %p128 = scmp.ne.s32.totalorder %s116, %s117
      %p129 = scmp.eq.s32.totalorder %s23, 1
      %p130 = por %p128, %p129
      %p132 = scmp.ne.s32.totalorder %s117, %s131
      %p133 = scmp.eq.s32.totalorder %s23, 0
      %p134 = por %p132, %p133
      %s135 = ssub.s32 %s17, %s24
      %p136 = scmp.eq.s32.totalorder %s135, 0
      %s138 = sadd.s32 %s137, 1
      %s139 = scalar_select %p136, %s137, %s138
      %p142 = pneg %p136
      %p143 = scmp.eq.s32.totalorder %s17, 1
      %p144 = por %p142, %p143
      %p145 = scmp.ne.s32.totalorder %s137, %s140
      %p146 = scmp.eq.s32.totalorder %s17, 0
      %p147 = por %p145, %p146
      %p148 = scmp.ne.s32.totalorder %s137, %s140
      %p149 = scmp.eq.s32.totalorder %s22, 1
      %p150 = por %p148, %p149
      %p151 = scmp.ne.s32.totalorder %s140, %s141
      %p152 = scmp.eq.s32.totalorder %s22, 0
      %p153 = por %p151, %p152
      %p154 = scmp.ne.s32.totalorder %s140, %s141
      %p155 = scmp.eq.s32.totalorder %s23, 1
      %p156 = por %p154, %p155
      %p158 = scmp.ne.s32.totalorder %s141, %s157
      %p159 = scmp.eq.s32.totalorder %s23, 0
      %p160 = por %p158, %p159
      %p161 = scmp.le.s32.totalorder 1, %s17
      %p162 = scmp.lt.s32.totalorder %s17, 3
      %p163 = pnand %p161, %p162
      %p164 = pneg %p163
      // Predicated region
      $region9: #{tpu_custom_call.1} parent=5 // pred_check
        _
      $region10: #{tpu_custom_call.1} parent=5 // pred_check_branch
        %166 = sbr.rel (%p163) target = $region12
      $region11: #{tpu_custom_call.1} parent=5 // pred_region
        %s167 = ssub.s32 %s17, 1
        // Predicated region
        $region13: #{tpu_custom_call.1} parent=11 // pred_check
          %p168 = pneg %p64
        $region14: #{tpu_custom_call.1} parent=11 // pred_check_branch
          %170 = sbr.rel (%p168) target = $region16
        $region15: #{tpu_custom_call.1} parent=11 // pred_region
          _
        $region16: #{tpu_custom_call.1} parent=11 // pred_fallthru
          _
        // Predicated region
        $region17: #{tpu_custom_call.1} parent=11 // pred_check
          %p171 = pneg %p85
        $region18: #{tpu_custom_call.1} parent=11 // pred_check_branch
          %173 = sbr.rel (%p171) target = $region20
        $region19: #{tpu_custom_call.1} parent=11 // pred_region
          _
        $region20: #{tpu_custom_call.1} parent=11 // pred_fallthru
          _
        // Predicated region
        $region21: #{tpu_custom_call.1} parent=11 // pred_check
          %p174 = pneg %p106
        $region22: #{tpu_custom_call.1} parent=11 // pred_check_branch
          %176 = sbr.rel (%p174) target = $region24
        $region23: #{tpu_custom_call.1} parent=11 // pred_region
          _
        $region24: #{tpu_custom_call.1} parent=11 // pred_fallthru
          _
        // Predicated region
        $region25: #{tpu_custom_call.1} parent=11 // pred_check
          %p177 = pneg %p127
        $region26: #{tpu_custom_call.1} parent=11 // pred_check_branch
          %179 = sbr.rel (%p177) target = $region28
        $region27: #{tpu_custom_call.1} parent=11 // pred_region
          _
        $region28: #{tpu_custom_call.1} parent=11 // pred_fallthru
          _
      $region12: #{tpu_custom_call.1} parent=5 // pred_fallthru
        _
      %p180 = scmp.lt.s32.totalorder %s17, 2
      // Predicated region
      $region29: #{tpu_custom_call.1} parent=5 // pred_check
        %p181 = pneg %p180
      $region30: #{tpu_custom_call.1} parent=5 // pred_check_branch
        %183 = sbr.rel (%p181) target = $region32
      $region31: #{tpu_custom_call.1} parent=5 // pred_region
        // Predicated region
        $region33: #{tpu_custom_call.1} parent=31 // pred_check
          %p184 = pneg %p37
        $region34: #{tpu_custom_call.1} parent=31 // pred_check_branch
          %186 = sbr.rel (%p184) target = $region36
        $region35: #{tpu_custom_call.1} parent=31 // pred_region
          %s187 = sand.u32 %s27, 1
          %s188 = scalar_lea.sflag [#allocation3], %s187
          %s189 = sand.u32 %s27, 1
          %s190 = smul.addr %s189, 16
          %s191 = scalar_lea.vmem [#allocation2], %s190
          %s193 = ssub.s32 256, 256
          %194 = vsyncadd %s188, %s193
          %s195 = smul.addr %s17, 2
          %s196 = smul.addr %s195, 128
          %s197 = scalar_lea.hbm %s0, %s196
          %s199 = sshll.u32 %s191, 4
          %s200 = int_to_ptr.vmem [resolvable:$true] %s199
          %202 = dma.hbm_to_vmem [thread:$0]  %s197, 256, %s200, %s188
        $region36: #{tpu_custom_call.1} parent=31 // pred_fallthru
          _
      $region32: #{tpu_custom_call.1} parent=5 // pred_fallthru
        _
      %p203 = scmp.le.s32.totalorder 1, %s17
      %p204 = scmp.lt.s32.totalorder %s17, 3
      %p205 = pnand %p203, %p204
      %p206 = pneg %p205
      // Predicated region
      $region37: #{tpu_custom_call.1} parent=5 // pred_check
        _
      $region38: #{tpu_custom_call.1} parent=5 // pred_check_branch
        %208 = sbr.rel (%p205) target = $region40
      $region39: #{tpu_custom_call.1} parent=5 // pred_region
        %s209 = ssub.s32 %s17, 1
        %s210 = sand.u32 %s30, 1
        %s211 = scalar_lea.sflag [#allocation3], %s210
        %s212 = sand.u32 %s30, 1
        %s213 = smul.addr %s212, 16
        %s214 = scalar_lea.vmem [#allocation2], %s213
        // Predicated region
        $region41: #{tpu_custom_call.1} parent=39 // pred_check
          %p215 = pneg %p43
        $region42: #{tpu_custom_call.1} parent=39 // pred_check_branch
          %217 = sbr.rel (%p215) target = $region44
        $region43: #{tpu_custom_call.1} parent=39 // pred_region
          %218 = dma.done %s211, 256
        $region44: #{tpu_custom_call.1} parent=39 // pred_fallthru
          _
        %s219 = sand.u32 %s30, 1
        %s220 = scalar_lea.sflag [#allocation3], %s219
        %s221 = sand.u32 %s30, 1
        %s222 = smul.addr %s221, 16
        %s223 = scalar_lea.vmem [#allocation2], %s222
        %p224 = pneg %p43
        %p225 = pneg %p40
        %p226 = pneg %p64
        %p227 = pneg %p61
        %p228 = pneg %p85
        %p229 = pneg %p82
        %p230 = pneg %p106
        %p231 = pneg %p103
        %p232 = pneg %p127
        %p233 = pneg %p124
        %p234 = pneg %p153
        %p235 = pneg %p150
        %s236 = sand.u32 %s140, 1
        %s237 = scalar_lea.sflag [#allocation4], %s236
        %s238 = sand.u32 %s140, 1
        %s239 = smul.addr %s238, 8
        %s240 = scalar_lea.vmem [#allocation5], %s239
        %v241 = vld [vmem:[%s214] sm:$0xff]
        %v242 = vld [vmem:[%s214 + $0x8] sm:$0xff]
        %v243 = vld [vmem:[%s1] sm:$0xff]
        %v244 = vlaneseq
        %v245 = vand.u32 %v244, 127
        %v246 = vadd.s32 %v245, 128
        %vm247 = vcmp.lt.s32.totalorder %v245, 0
        %v248 = vsub.s32 0, %v245
        %v249 = vsel %vm247, %v248, %v245
        %v250 = vshrl.u32 %v249, 4
        %v251 = vand.u32 %v249, 15
        %v252 = vsub.s32 0, %v251
        %v253 = vsel %vm247, %v252, %v251
        %vm254 = vcmp.lt.s32.totalorder %v246, 0
        %v255 = vsub.s32 0, %v246
        %v256 = vsel %vm254, %v255, %v246
        %v257 = vshrl.u32 %v256, 4
        %v258 = vand.u32 %v256, 15
        %v259 = vsub.s32 0, %v258
        %v260 = vsel %vm254, %v259, %v258
        %vm261 = vcmp.ne.s32.totalorder %v253, 0
        %vm262 = vcmp.ne.s32.totalorder %v260, 0
        %vm263 = vcmp.lt.s32.totalorder %v253, 0
        %vm264 = vcmp.lt.s32.totalorder %v260, 0
        %vm265 = vmand %vm263, %vm261
        %vm266 = vmand %vm264, %vm262
        %v267 = vadd.s32 %v253, 16
        %v268 = vadd.s32 %v260, 16
        %v269 = vsel %vm265, %v267, %v253
        %v270 = vsel %vm266, %v268, %v260
        %vm271 = vcmp.ge.s32.totalorder %v269, 1
        %vm272 = vcmp.ge.s32.totalorder %v270, 1
        %vm273 = vcmp.lt.s32.totalorder %v269, 15
        %vm274 = vcmp.lt.s32.totalorder %v270, 15
        %277 = vrot.lane.b32.xlu0 %v241, 17
        %v278 = vpop.permute.xlu0 %277
        %279 = vrot.lane.b32.xlu0 %v242, 17
        %v280 = vpop.permute.xlu0 %279
        %vm281 = vcmask 138240
        %v282 = vsel %vm281, %v278, %v280
        %v285 = vsel %vm281, 0.0, %v278
        %v286 = vsel %vm271, %v285, 0.0
        %v287 = vsel %vm272, %v282, 0.0
        %288 = vrot.lane.b32.xlu0 %v241, 16
        %v289 = vpop.permute.xlu0 %288
        %290 = vrot.lane.b32.xlu0 %v242, 16
        %v291 = vpop.permute.xlu0 %290
        %vm292 = vcmask 130048
        %v293 = vsel %vm292, %v289, %v291
        %v296 = vsel %vm292, 0.0, %v289
        %297 = vrot.lane.b32.xlu0 %v241, 15
        %v298 = vpop.permute.xlu0 %297
        %299 = vrot.lane.b32.xlu0 %v242, 15
        %v300 = vpop.permute.xlu0 %299
        %vm301 = vcmask 121856
        %v302 = vsel %vm301, %v298, %v300
        %v305 = vsel %vm301, 0.0, %v298
        %v306 = vsel %vm273, %v305, 0.0
        %v307 = vsel %vm274, %v302, 0.0
        %308 = vrot.lane.b32.xlu0 %v241, 1
        %v309 = vpop.permute.xlu0 %308
        %310 = vrot.lane.b32.xlu0 %v242, 1
        %v311 = vpop.permute.xlu0 %310
        %vm312 = vcmask 7168
        %v313 = vsel %vm312, %v309, %v311
        %v316 = vsel %vm312, 0.0, %v309
        %v317 = vsel %vm271, %v316, 0.0
        %v318 = vsel %vm272, %v313, 0.0
        %319 = vrot.lane.b32.xlu0 %v241, 127
        %v320 = vpop.permute.xlu0 %319
        %321 = vrot.lane.b32.xlu0 %v242, 127
        %v322 = vpop.permute.xlu0 %321
        %vm323 = vcmask 1039360
        %v324 = vsel %vm323, %v320, %v322
        %v327 = vsel %vm323, %v322, 0.0
        %v328 = vsel %vm273, %v324, 0.0
        %v329 = vsel %vm274, %v327, 0.0
        %330 = vrot.lane.b32.xlu0 %v241, 113
        %v331 = vpop.permute.xlu0 %330
        %332 = vrot.lane.b32.xlu0 %v242, 113
        %v333 = vpop.permute.xlu0 %332
        %vm334 = vcmask 924672
        %v335 = vsel %vm334, %v331, %v333
        %v338 = vsel %vm334, %v333, 0.0
        %v339 = vsel %vm271, %v335, 0.0
        %v340 = vsel %vm272, %v338, 0.0
        %341 = vrot.lane.b32.xlu0 %v241, 112
        %v342 = vpop.permute.xlu0 %341
        %343 = vrot.lane.b32.xlu0 %v242, 112
        %v344 = vpop.permute.xlu0 %343
        %vm345 = vcmask 916480
        %v346 = vsel %vm345, %v342, %v344
        %v349 = vsel %vm345, %v344, 0.0
        %350 = vrot.lane.b32.xlu0 %v241, 111
        %v351 = vpop.permute.xlu0 %350
        %352 = vrot.lane.b32.xlu0 %v242, 111
        %v353 = vpop.permute.xlu0 %352
        %vm354 = vcmask 908288
        %v355 = vsel %vm354, %v351, %v353
        %v358 = vsel %vm354, %v353, 0.0
        %v359 = vsel %vm273, %v355, 0.0
        %v360 = vsel %vm274, %v358, 0.0
        %v361 = vld [vmem:[%s2] sm:$0xff]
        %363 = vset.pattern.permute.xlu0 0
        %364 = vperm.xlu0 %363, %v361
        %v365 = vpop.permute.xlu0 %364
        %vm367 = vcmask 588800
        %v369 = vsel %vm367, %v243, 0
        %371 = vmatprep.subr.mxu0 0.0
        %372 = vmatpush1.msra.mxu0 0.0
        %373 = vmatprep.subr.mxu0 0.0
        %374 = vmatpush1.msra.mxu0 0.0
        %375 = vmatprep.subr.mxu0 0.0
        %376 = vmatpush1.msra.mxu0 0.0
        %377 = vmatprep.subr.mxu0 0.0
        %378 = vmatpush1.msra.mxu0 0.0
        %379 = vmatprep.subr.mxu0 0.0
        %380 = vmatpush1.msra.mxu0 0.0
        %381 = vmatprep.subr.mxu0 0.0
        %382 = vmatpush1.msra.mxu0 0.0
        %383 = vmatprep.subr.mxu0 0.0
        %384 = vmatpush1.msra.mxu0 0.0
        %385 = vmatprep.subr.mxu0 %v360
        %386 = vmatpush1.msra.mxu0 %v359
        %387 = vmatprep.subr.mxu0 %v349
        %388 = vmatpush1.msra.mxu0 %v346
        %389 = vmatprep.subr.mxu0 %v340
        %390 = vmatpush1.msra.mxu0 %v339
        %391 = vmatprep.subr.mxu0 %v329
        %392 = vmatpush1.msra.mxu0 %v328
        %393 = vmatprep.subr.mxu0 %v242
        %394 = vmatpush1.msra.mxu0 %v241
        %395 = vmatprep.subr.mxu0 %v318
        %396 = vmatpush1.msra.mxu0 %v317
        %397 = vmatprep.subr.mxu0 %v307
        %398 = vmatpush1.msra.mxu0 %v306
        %399 = vmatprep.subr.mxu0 %v293
        %400 = vmatpush1.msra.mxu0 %v296
        %401 = vmatprep.subr.mxu0 %v287
        %402 = vmatpush1.msra.mxu0 %v286
        %403 = vmatprep.subr.mxu0 0.0
        %404 = vmatpush2.msra.mxu0 0.0
        %405 = vmatprep.subr.mxu0 0.0
        %406 = vmatpush2.msra.mxu0 0.0
        %407 = vmatprep.subr.mxu0 0.0
        %408 = vmatpush2.msra.mxu0 0.0
        %409 = vmatprep.subr.mxu0 0.0
        %410 = vmatpush2.msra.mxu0 0.0
        %411 = vmatprep.subr.mxu0 0.0
        %412 = vmatpush2.msra.mxu0 0.0
        %413 = vmatprep.subr.mxu0 0.0
        %414 = vmatpush2.msra.mxu0 0.0
        %415 = vmatprep.subr.mxu0 0.0
        %416 = vmatpush2.msra.mxu0 0.0
        %417 = vmatprep.subr.mxu0 0.0
        %418 = vmatpush2.msra.mxu0 0.0
        %419 = vmatprep.subr.mxu0 0.0
        %420 = vmatpush2.msra.mxu0 0.0
        %421 = vmatprep.subr.mxu0 0.0
        %422 = vmatpush2.msra.mxu0 0.0
        %423 = vmatprep.subr.mxu0 0.0
        %424 = vmatpush2.msra.mxu0 0.0
        %425 = vmatprep.subr.mxu0 0.0
        %426 = vmatpush2.msra.mxu0 0.0
        %427 = vmatprep.subr.mxu0 0.0
        %428 = vmatpush2.msra.mxu0 0.0
        %429 = vmatprep.subr.mxu0 0.0
        %430 = vmatpush2.msra.mxu0 0.0
        %431 = vmatprep.subr.mxu0 0.0
        %432 = vmatpush2.msra.mxu0 0.0
        %433 = vmatprep.subr.mxu0 0.0
        %434 = vmatpush2.msra.mxu0 0.0
        %435 = vmatprep.mubr.f32.mxu0 0.0
        %436 = vmatmul.mubr.f32.gmra.mxu0 %v369
        %v437 = vpop.f32.mrf.mxu0
        %v438 = vadd.f32 %v365, %v437
        %v439 = vpop.f32.mrf.mxu0
        %v440 = vadd.f32 %v365, %v439
        %441 = vdwg.mxu0
        %vm442 = vcmp.gt.f32.partialorder %v438, 0.0
        %vm443 = vcmp.gt.f32.partialorder %v440, 0.0
        %v444 = vmul.f32 %v438, 0.01
        %v445 = vmul.f32 %v440, 0.01
        %v446 = vsel %vm442, %v438, %v444
        %v447 = vsel %vm443, %v440, %v445
        %v448 = vld [vmem:[%s3] sm:$0xf]
        %451 = vrot.lane.b32.xlu0 %v446, 17
        %v452 = vpop.permute.xlu0 %451
        %453 = vrot.lane.b32.xlu0 %v447, 17
        %v454 = vpop.permute.xlu0 %453
        %v455 = vsel %vm281, %v452, %v454
        %v458 = vsel %vm281, 0.0, %v452
        %v459 = vsel %vm271, %v458, 0.0
        %v460 = vsel %vm272, %v455, 0.0
        %461 = vrot.lane.b32.xlu0 %v446, 16
        %v462 = vpop.permute.xlu0 %461
        %463 = vrot.lane.b32.xlu0 %v447, 16
        %v464 = vpop.permute.xlu0 %463
        %v465 = vsel %vm292, %v462, %v464
        %v468 = vsel %vm292, 0.0, %v462
        %469 = vrot.lane.b32.xlu0 %v446, 15
        %v470 = vpop.permute.xlu0 %469
        %471 = vrot.lane.b32.xlu0 %v447, 15
        %v472 = vpop.permute.xlu0 %471
        %v473 = vsel %vm301, %v470, %v472
        %v476 = vsel %vm301, 0.0, %v470
        %v477 = vsel %vm273, %v476, 0.0
        %v478 = vsel %vm274, %v473, 0.0
        %479 = vrot.lane.b32.xlu0 %v446, 1
        %v480 = vpop.permute.xlu0 %479
        %481 = vrot.lane.b32.xlu0 %v447, 1
        %v482 = vpop.permute.xlu0 %481
        %v483 = vsel %vm312, %v480, %v482
        %v486 = vsel %vm312, 0.0, %v480
        %v487 = vsel %vm271, %v486, 0.0
        %v488 = vsel %vm272, %v483, 0.0
        %489 = vrot.lane.b32.xlu0 %v446, 127
        %v490 = vpop.permute.xlu0 %489
        %491 = vrot.lane.b32.xlu0 %v447, 127
        %v492 = vpop.permute.xlu0 %491
        %v493 = vsel %vm323, %v490, %v492
        %v496 = vsel %vm323, %v492, 0.0
        %v497 = vsel %vm273, %v493, 0.0
        %v498 = vsel %vm274, %v496, 0.0
        %499 = vrot.lane.b32.xlu0 %v446, 113
        %v500 = vpop.permute.xlu0 %499
        %501 = vrot.lane.b32.xlu0 %v447, 113
        %v502 = vpop.permute.xlu0 %501
        %v503 = vsel %vm334, %v500, %v502
        %v506 = vsel %vm334, %v502, 0.0
        %v507 = vsel %vm271, %v503, 0.0
        %v508 = vsel %vm272, %v506, 0.0
        %509 = vrot.lane.b32.xlu0 %v446, 112
        %v510 = vpop.permute.xlu0 %509
        %511 = vrot.lane.b32.xlu0 %v447, 112
        %v512 = vpop.permute.xlu0 %511
        %v513 = vsel %vm345, %v510, %v512
        %v516 = vsel %vm345, %v512, 0.0
        %517 = vrot.lane.b32.xlu0 %v446, 111
        %v518 = vpop.permute.xlu0 %517
        %519 = vrot.lane.b32.xlu0 %v447, 111
        %v520 = vpop.permute.xlu0 %519
        %v521 = vsel %vm354, %v518, %v520
        %v524 = vsel %vm354, %v520, 0.0
        %v525 = vsel %vm273, %v521, 0.0
        %v526 = vsel %vm274, %v524, 0.0
        %v527 = vld [vmem:[%s4] sm:$0xf]
        %529 = vset.pattern.permute.xlu0 0
        %530 = vperm.xlu0 %529, %v527
        %v531 = vpop.permute.xlu0 %530
        %v534 = vsel %vm367, %v448, 0
        %536 = vmatprep.subr.mxu0 0.0
        %537 = vmatpush1.msra.mxu0 0.0
        %538 = vmatprep.subr.mxu0 0.0
        %539 = vmatpush1.msra.mxu0 0.0
        %540 = vmatprep.subr.mxu0 0.0
        %541 = vmatpush1.msra.mxu0 0.0
        %542 = vmatprep.subr.mxu0 0.0
        %543 = vmatpush1.msra.mxu0 0.0
        %544 = vmatprep.subr.mxu0 0.0
        %545 = vmatpush1.msra.mxu0 0.0
        %546 = vmatprep.subr.mxu0 0.0
        %547 = vmatpush1.msra.mxu0 0.0
        %548 = vmatprep.subr.mxu0 0.0
        %549 = vmatpush1.msra.mxu0 0.0
        %550 = vmatprep.subr.mxu0 %v526
        %551 = vmatpush1.msra.mxu0 %v525
        %552 = vmatprep.subr.mxu0 %v516
        %553 = vmatpush1.msra.mxu0 %v513
        %554 = vmatprep.subr.mxu0 %v508
        %555 = vmatpush1.msra.mxu0 %v507
        %556 = vmatprep.subr.mxu0 %v498
        %557 = vmatpush1.msra.mxu0 %v497
        %558 = vmatprep.subr.mxu0 %v447
        %559 = vmatpush1.msra.mxu0 %v446
        %560 = vmatprep.subr.mxu0 %v488
        %561 = vmatpush1.msra.mxu0 %v487
        %562 = vmatprep.subr.mxu0 %v478
        %563 = vmatpush1.msra.mxu0 %v477
        %564 = vmatprep.subr.mxu0 %v465
        %565 = vmatpush1.msra.mxu0 %v468
        %566 = vmatprep.subr.mxu0 %v460
        %567 = vmatpush1.msra.mxu0 %v459
        %568 = vmatprep.subr.mxu0 0.0
        %569 = vmatpush2.msra.mxu0 0.0
        %570 = vmatprep.subr.mxu0 0.0
        %571 = vmatpush2.msra.mxu0 0.0
        %572 = vmatprep.subr.mxu0 0.0
        %573 = vmatpush2.msra.mxu0 0.0
        %574 = vmatprep.subr.mxu0 0.0
        %575 = vmatpush2.msra.mxu0 0.0
        %576 = vmatprep.subr.mxu0 0.0
        %577 = vmatpush2.msra.mxu0 0.0
        %578 = vmatprep.subr.mxu0 0.0
        %579 = vmatpush2.msra.mxu0 0.0
        %580 = vmatprep.subr.mxu0 0.0
        %581 = vmatpush2.msra.mxu0 0.0
        %582 = vmatprep.subr.mxu0 0.0
        %583 = vmatpush2.msra.mxu0 0.0
        %584 = vmatprep.subr.mxu0 0.0
        %585 = vmatpush2.msra.mxu0 0.0
        %586 = vmatprep.subr.mxu0 0.0
        %587 = vmatpush2.msra.mxu0 0.0
        %588 = vmatprep.subr.mxu0 0.0
        %589 = vmatpush2.msra.mxu0 0.0
        %590 = vmatprep.subr.mxu0 0.0
        %591 = vmatpush2.msra.mxu0 0.0
        %592 = vmatprep.subr.mxu0 0.0
        %593 = vmatpush2.msra.mxu0 0.0
        %594 = vmatprep.subr.mxu0 0.0
        %595 = vmatpush2.msra.mxu0 0.0
        %596 = vmatprep.subr.mxu0 0.0
        %597 = vmatpush2.msra.mxu0 0.0
        %598 = vmatprep.subr.mxu0 0.0
        %599 = vmatpush2.msra.mxu0 0.0
        %600 = vmatprep.mubr.f32.mxu0 0.0
        %601 = vmatmul.mubr.f32.gmra.mxu0 %v534
        %v602 = vpop.f32.mrf.mxu0
        %v603 = vadd.f32 %v531, %v602
        %v604 = vpop.f32.mrf.mxu0
        %v605 = vadd.f32 %v531, %v604
        %606 = vdwg.mxu0
        %vm607 = vcmp.gt.f32.partialorder %v603, 0.0
        %vm608 = vcmp.gt.f32.partialorder %v605, 0.0
        %v609 = vmul.f32 %v603, 0.01
        %v610 = vmul.f32 %v605, 0.01
        %v611 = vsel %vm607, %v603, %v609
        %v612 = vsel %vm608, %v605, %v610
        %v615 = vcombine.low %v611, %v612
        %617 = vst [vmem:[%s240] sm:$0xff] %v615
        %s618 = sand.u32 %s140, 1
        %s619 = scalar_lea.sflag [#allocation4], %s618
        %s620 = sand.u32 %s140, 1
        %s621 = smul.addr %s620, 8
        %s622 = scalar_lea.vmem [#allocation5], %s621
        // Predicated region
        $region45: #{tpu_custom_call.1} parent=39 // pred_check
          %p623 = pneg %p150
        $region46: #{tpu_custom_call.1} parent=39 // pred_check_branch
          %625 = sbr.rel (%p623) target = $region48
        $region47: #{tpu_custom_call.1} parent=39 // pred_region
          %s627 = ssub.s32 128, 128
          %628 = vsyncadd %s619, %s627
          %s629 = smul.addr %s22, 2
          %s630 = smul.addr %s629, 64
          %s631 = scalar_lea.hbm %s5, %s630
          %s633 = sshll.u32 %s622, 4
          %s634 = int_to_ptr.vmem [resolvable:$true] %s633
          %636 = dma.vmem_to_hbm [thread:$0]  %s634, 128, %s631, %s619
        $region48: #{tpu_custom_call.1} parent=39 // pred_fallthru
          _
      $region40: #{tpu_custom_call.1} parent=5 // pred_fallthru
        _
      %p637 = scmp.le.s32.totalorder 2, %s17
      // Predicated region
      $region49: #{tpu_custom_call.1} parent=5 // pred_check
        %p638 = pneg %p637
      $region50: #{tpu_custom_call.1} parent=5 // pred_check_branch
        %640 = sbr.rel (%p638) target = $region52
      $region51: #{tpu_custom_call.1} parent=5 // pred_region
        %s641 = ssub.s32 %s17, 2
        // Predicated region
        $region53: #{tpu_custom_call.1} parent=51 // pred_check
          %p642 = pneg %p156
        $region54: #{tpu_custom_call.1} parent=51 // pred_check_branch
          %644 = sbr.rel (%p642) target = $region56
        $region55: #{tpu_custom_call.1} parent=51 // pred_region
          %s645 = sand.u32 %s141, 1
          %s646 = scalar_lea.sflag [#allocation4], %s645
          %s647 = sand.u32 %s141, 1
          %s648 = smul.addr %s647, 8
          %s649 = scalar_lea.vmem [#allocation5], %s648
          %650 = dma.done %s646, 128
        $region56: #{tpu_custom_call.1} parent=51 // pred_fallthru
          _
      $region52: #{tpu_custom_call.1} parent=5 // pred_fallthru
        _
    $region6: #{tpu_custom_call.1} parent=1 // loop_footer
      %s21 = sadd.s32 1, %s17
    $region7: #{tpu_custom_call.1} parent=1 // loop_footer_branch
      %16 = sbr.rel target = $region3
    $region8: #{tpu_custom_call.1} parent=1 // loop_exit
      _
    %651 = vsyncpa [#allocation3], 1
    %s652 = scalar_lea.sflag [#allocation3], 1
    %653 = vsyncpa %s652, 1
    %654 = vsyncpa [#allocation4], 1
    %s655 = scalar_lea.sflag [#allocation4], 1
    %656 = vsyncpa %s655, 1

</llo_original>
